<compile_context>
chip_gen: v6e
topology: v6e:2x2x1
jax: 0.10.0
libtpu: 0.0.40
codegen_flags: <defaults>
</compile_context>

<pallas_src>
import functools

import jax
import jax.numpy as jnp
from jax import lax
from jax.experimental import pallas as pl
from jax.experimental.pallas import tpu as pltpu


def _round_up(v, m):
    return ((v + m - 1) // m) * m


def _pick_tile_rows(H, W, target_lanes=1024):
    """Rows per spatial tile: TH | H and TH*W a multiple of 128 lanes if possible."""
    cands = [t for t in range(1, H + 1) if H % t == 0 and (t * W) % 128 == 0]
    if not cands:
        return H  # single full-extent tile (block == full array dim is legal)
    # Prefer >=2 tiles (exercise pipelining / megacore), closest to target lanes.
    multi = [t for t in cands if H // t >= 2] or cands
    return min(multi, key=lambda t: abs(t * W - target_lanes))


def fused_mbconv_kernel(x_ref, ht_ref, hb_ref, w1_ref, b1_ref, w2_ref, b2_ref,
                        o_ref, *, W, fuse_k):
    """One (batch, TH-row stripe) per grid step.

    x_ref : (1, Cin_p, TH*W)       stripe, flattened spatial on lanes (f32)
    ht_ref: (1, 1, Cin_p, W+1)     [zero col | row above stripe]      (f32)
    hb_ref: (1, 1, Cin_p, W+1)     [row below stripe | zero col]      (f32)
    w1_ref: (Cmid_p, 9*Cin_p)      3x3 weights, BN1 scale folded, bf16, K=(ky,kx,c)
    b1_ref: (Cmid_p, 1)            folded BN1 bias (f32)
    w2_ref: (Cout_p, Cmid_p)       1x1 weights, BN2 scale folded, bf16
    b2_ref: (Cout_p, 1)            folded BN2 bias (f32)
    o_ref : (1, Cout_p, TH*W)      output stripe (f32), NCHW flattened spatial
    """
    THW = x_ref.shape[2]
    cin_p = x_ref.shape[1]
    cmid_p = w1_ref.shape[0]

    xc = x_ref[0]                                   # (Cin_p, THW)
    xt = ht_ref[0, 0]                               # (Cin_p, W+1)
    xb = hb_ref[0, 0]                               # (Cin_p, W+1)
    # Flat-with-halo buffer: tap (ky,kx) is the slice [ky*W+kx, ky*W+kx+THW).
    buf = jnp.concatenate([xt, xc, xb], axis=1)     # (Cin_p, THW + 2W + 2)

    # Hoisted W-wraparound masks (reused by the 3 kx==0 and 3 kx==2 taps).
    col = lax.broadcasted_iota(jnp.int32, (1, THW), 1) % W
    mask_l = col != 0
    mask_r = col != (W - 1)

    patches = []
    acc = jnp.zeros((cmid_p, THW), jnp.float32)
    for ky in range(3):
        for kx in range(3):
            s = ky * W + kx
            p = buf[:, s:s + THW]                   # (Cin_p, THW)
            if kx == 0:       # dx = -1: col 0 would wrap to previous row
                p = jnp.where(mask_l, p, 0.0)
            elif kx == 2:     # dx = +1: col W-1 would wrap to next row
                p = jnp.where(mask_r, p, 0.0)
            if fuse_k:
                patches.append(p)
            else:
                # Large-Cin path (v7x/MRB friendly): accumulate per-tap dots,
                # never materialize the (9*Cin_p, THW) slab in VMEM.
                t_idx = ky * 3 + kx
                acc = acc + jnp.dot(
                    w1_ref[:, t_idx * cin_p:(t_idx + 1) * cin_p],
                    p.astype(jnp.bfloat16),
                    preferred_element_type=jnp.float32)
    if fuse_k:
        # Small Cin: one fused-K MXU contraction (K = 9*Cin_p) keeps the MXU full.
        im2col = jnp.concatenate(patches, axis=0).astype(jnp.bfloat16)
        acc = jnp.dot(w1_ref[...], im2col, preferred_element_type=jnp.float32)

    # 3x3 conv epilogue: folded BN1 bias + ReLU6 (f32).
    h = jnp.clip(acc + b1_ref[...], 0.0, 6.0)

    # 1x1 conv (+ folded BN2), bf16 operands, f32 accumulate; no activation.
    out = jnp.dot(w2_ref[...], h.astype(jnp.bfloat16),
                  preferred_element_type=jnp.float32)
    o_ref[0] = (out + b2_ref[...]).astype(o_ref.dtype)


def fused_mbconv_pallas(x_nchw, w1, bn1, w2, bn2, eps=1e-5):
    """x_nchw: (N, Cin, H, W) f32.  w1: (Cmid, Cin, 3, 3) OIHW.  w2: (Cout, Cmid, 1, 1)."""
    N, Cin, H, W = x_nchw.shape
    Cmid = w1.shape[0]
    Cout = w2.shape[0]
    HW = H * W

    Cin_p = _round_up(Cin, 8)
    Cmid_p = _round_up(Cmid, 8)
    Cout_p = _round_up(Cout, 8)

    TH = _pick_tile_rows(H, W)
    n_tiles = H // TH
    THW = TH * W

    # ---- fold BN into weights (bf16) / biases (f32); tiny tensors ----
    s1 = bn1["gamma"] * lax.rsqrt(bn1["var"] + eps)
    b1 = bn1["beta"] - bn1["mean"] * s1
    s2 = bn2["gamma"] * lax.rsqrt(bn2["var"] + eps)
    b2 = bn2["beta"] - bn2["mean"] * s2

    w1_t = jnp.transpose(w1 * s1[:, None, None, None], (0, 2, 3, 1))  # (Cmid,3,3,Cin)
    w1_t = jnp.pad(w1_t, ((0, Cmid_p - Cmid), (0, 0), (0, 0), (0, Cin_p - Cin)))
    w1_k = w1_t.reshape(Cmid_p, 9 * Cin_p).astype(jnp.bfloat16)       # K order (ky,kx,c)
    b1_k = jnp.pad(b1, (0, Cmid_p - Cmid)).reshape(Cmid_p, 1).astype(jnp.float32)

    w2_k = jnp.pad(w2[:, :, 0, 0] * s2[:, None],
                   ((0, Cout_p - Cout), (0, Cmid_p - Cmid))).astype(jnp.bfloat16)
    b2_k = jnp.pad(b2, (0, Cout_p - Cout)).reshape(Cout_p, 1).astype(jnp.float32)

    # ---- activation: NCHW with flattened spatial; sublane round-up only.
    # (Production channel counts are already multiples of 8, so this pad is a no-op.)
    x_flat = x_nchw.reshape(N, Cin, HW)
    if Cin_p != Cin:
        x_flat = jnp.pad(x_flat, ((0, 0), (0, Cin_p - Cin), (0, 0)))

    # Per-tile halo rows (tiny): row above / below each TH-row stripe, zeros at
    # the image borders.  Padded by one zero column so the kernel's flat buffer
    # [top | tile | bottom] has the +-1 element slack needed by the corner taps.
    x4 = x_flat.reshape(N, Cin_p, H, W)
    xr = jnp.pad(x4, ((0, 0), (0, 0), (1, 1), (0, 0)))
    halo_top = jnp.transpose(xr[:, :, 0:H:TH, :], (0, 2, 1, 3))        # (N,nt,Cin_p,W)
    halo_bot = jnp.transpose(xr[:, :, TH + 1::TH, :], (0, 2, 1, 3))    # (N,nt,Cin_p,W)
    halo_top = jnp.pad(halo_top, ((0, 0), (0, 0), (0, 0), (1, 0)))     # (N,nt,Cin_p,W+1)
    halo_bot = jnp.pad(halo_bot, ((0, 0), (0, 0), (0, 0), (0, 1)))     # (N,nt,Cin_p,W+1)

    # ---- compiler hints ----
    flops = 2 * (9 * Cin * Cmid + Cmid * Cout) * HW * N
    bytes_accessed = int(x_flat.size * 4 + halo_top.size * 4 + halo_bot.size * 4
                         + w1_k.size * 2 + w2_k.size * 2
                         + (b1_k.size + b2_k.size) * 4 + N * Cout_p * HW * 4)
    per_step = (2 * (Cin_p * THW * 4 + Cout_p * THW * 4 + 2 * Cin_p * (W + 1) * 4)
                + 2 * (int(w1_k.size) * 2 + int(w2_k.size) * 2)
                + 9 * Cin_p * THW * (4 + 2) + Cmid_p * THW * (4 + 2))
    vmem_limit = int(min(max(4 * per_step, 32 * 1024 * 1024), 64 * 1024 * 1024))

    kernel = functools.partial(fused_mbconv_kernel, W=W, fuse_k=(Cin_p < 128))
    out = pl.pallas_call(
        kernel,
        out_shape=jax.ShapeDtypeStruct((N, Cout_p, HW), jnp.float32),
        grid_spec=pltpu.PrefetchScalarGridSpec(
            num_scalar_prefetch=0,
            grid=(N, n_tiles),
            in_specs=[
                pl.BlockSpec((1, Cin_p, THW), lambda n, t: (n, 0, t)),
                pl.BlockSpec((1, 1, Cin_p, W + 1), lambda n, t: (n, t, 0, 0)),
                pl.BlockSpec((1, 1, Cin_p, W + 1), lambda n, t: (n, t, 0, 0)),
                pl.BlockSpec((Cmid_p, 9 * Cin_p), lambda n, t: (0, 0)),
                pl.BlockSpec((Cmid_p, 1), lambda n, t: (0, 0)),
                pl.BlockSpec((Cout_p, Cmid_p), lambda n, t: (0, 0)),
                pl.BlockSpec((Cout_p, 1), lambda n, t: (0, 0)),
            ],
            out_specs=pl.BlockSpec((1, Cout_p, THW), lambda n, t: (n, 0, t)),
        ),
        compiler_params=pltpu.CompilerParams(
            dimension_semantics=("parallel", "parallel"),
            vmem_limit_bytes=vmem_limit),
        cost_estimate=pl.CostEstimate(
            flops=flops, transcendentals=0, bytes_accessed=bytes_accessed),
    )(x_flat, halo_top, halo_bot, w1_k, b1_k, w2_k, b2_k)

    # Trailing-dim split + channel slice only (no HBM transpose pass).
    return out[:, :Cout, :].reshape(N, Cout, H, W)


def reference_jax(x_nchw, w1, bn1, w2, bn2, eps=1e-5):
    """Plain-JAX f32 reference mirroring the PyTorch module (eval-mode BN)."""
    dn = ("NCHW", "OIHW", "NCHW")

    def bn_apply(y, bn):
        scale = bn["gamma"] / jnp.sqrt(bn["var"] + eps)
        bias = bn["beta"] - bn["mean"] * scale
        return y * scale[None, :, None, None] + bias[None, :, None, None]

    y = lax.conv_general_dilated(x_nchw, w1, (1, 1), ((1, 1), (1, 1)),
                                 dimension_numbers=dn)
    y = bn_apply(y, bn1)
    y = jnp.clip(y, 0.0, 6.0)                 # ReLU6
    y = lax.conv_general_dilated(y, w2, (1, 1), ((0, 0), (0, 0)),
                                 dimension_numbers=dn)
    y = bn_apply(y, bn2)
    return y


if __name__ == "__main__":
    N, Cin, H, W = 2, 4, 16, 16
    expand_ratio = 6
    Cmid = round(Cin * expand_ratio)   # 24
    Cout = Cin                         # 4

    key = jax.random.PRNGKey(0)
    kx_, kw1, kw2 = jax.random.split(key, 3)

    x = jax.random.normal(kx_, (N, Cin, H, W), jnp.float32)
    w1 = jax.random.normal(kw1, (Cmid, Cin, 3, 3), jnp.float32) * 0.1
    w2 = jax.random.normal(kw2, (Cout, Cmid, 1, 1), jnp.float32) * 0.1

    bn1 = {
        "gamma": 1.0 + 0.05 * jnp.arange(Cmid, dtype=jnp.float32),
        "beta": 0.02 * jnp.arange(Cmid, dtype=jnp.float32),
        "mean": 0.01 * jnp.arange(Cmid, dtype=jnp.float32),
        "var": 1.0 + 0.03 * jnp.arange(Cmid, dtype=jnp.float32),
    }
    bn2 = {
        "gamma": 1.0 + 0.1 * jnp.arange(Cout, dtype=jnp.float32),
        "beta": 0.03 * jnp.arange(Cout, dtype=jnp.float32),
        "mean": 0.02 * jnp.arange(Cout, dtype=jnp.float32),
        "var": 1.0 + 0.05 * jnp.arange(Cout, dtype=jnp.float32),
    }

    out = fused_mbconv_pallas(x, w1, bn1, w2, bn2)
    out = jax.block_until_ready(out)

    ref = jax.block_until_ready(reference_jax(x, w1, bn1, w2, bn2))
    assert out.shape == (N, Cout, H, W), out.shape
    # bf16 MXU operands (f32 accumulate/epilogue): relaxed tolerance vs. f32 ref.
    assert jnp.allclose(out, ref, atol=5e-2, rtol=5e-2), \
        float(jnp.max(jnp.abs(out - ref)))

    print("KERNEL_OK")
</pallas_src>

<mosaic_0001>
module attributes {stable_mosaic.version = 11 : i64} {
  func.func @fused_mbconv_kernel(%arg0: i32, %arg1: i32, %arg2: memref<1x8x128xf32, #tpu.memory_space<vmem>>, %arg3: memref<1x1x8x17xf32, #tpu.memory_space<vmem>>, %arg4: memref<1x1x8x17xf32, #tpu.memory_space<vmem>>, %arg5: memref<24x72xbf16, #tpu.memory_space<vmem>>, %arg6: memref<24x1xf32, #tpu.memory_space<vmem>>, %arg7: memref<8x24xbf16, #tpu.memory_space<vmem>>, %arg8: memref<8x1xf32, #tpu.memory_space<vmem>>, %arg9: memref<1x8x128xf32, #tpu.memory_space<vmem>>) attributes {dimension_semantics = [#tpu.dimension_semantics<parallel>, #tpu.dimension_semantics<parallel>], iteration_bounds = array<i64: 2, 2>, scalar_prefetch = 0 : i64, scratch_operands = 0 : i64, tpu.core_type = #tpu.core_type<tc>, window_params = [{transform_indices = @transform_0, window_bounds = array<i64: 1, 8, 128>}, {transform_indices = @transform_1, window_bounds = array<i64: 1, 1, 8, 17>}, {transform_indices = @transform_2, window_bounds = array<i64: 1, 1, 8, 17>}, {pipeline_mode = #tpu.pipeline_mode<synchronous>, transform_indices = @transform_3, window_bounds = array<i64: 24, 72>}, {pipeline_mode = #tpu.pipeline_mode<synchronous>, transform_indices = @transform_4, window_bounds = array<i64: 24, 1>}, {pipeline_mode = #tpu.pipeline_mode<synchronous>, transform_indices = @transform_5, window_bounds = array<i64: 8, 24>}, {pipeline_mode = #tpu.pipeline_mode<synchronous>, transform_indices = @transform_6, window_bounds = array<i64: 8, 1>}, {transform_indices = @transform_7, window_bounds = array<i64: 1, 8, 128>}]} {
    %c0 = arith.constant 0 : index
    %c0_0 = arith.constant 0 : index
    %c0_1 = arith.constant 0 : index
    %0 = vector.load %arg2[%c0, %c0_0, %c0_1] : memref<1x8x128xf32, #tpu.memory_space<vmem>>, vector<1x8x128xf32>
    %1 = vector.shape_cast %0 : vector<1x8x128xf32> to vector<8x128xf32>
    %c0_2 = arith.constant 0 : index
    %c0_3 = arith.constant 0 : index
    %c0_4 = arith.constant 0 : index
    %c0_5 = arith.constant 0 : index
    %2 = vector.load %arg3[%c0_2, %c0_3, %c0_4, %c0_5] : memref<1x1x8x17xf32, #tpu.memory_space<vmem>>, vector<1x1x8x17xf32>
    %3 = vector.shape_cast %2 : vector<1x1x8x17xf32> to vector<8x17xf32>
    %c0_6 = arith.constant 0 : index
    %c0_7 = arith.constant 0 : index
    %c0_8 = arith.constant 0 : index
    %c0_9 = arith.constant 0 : index
    %4 = vector.load %arg4[%c0_6, %c0_7, %c0_8, %c0_9] : memref<1x1x8x17xf32, #tpu.memory_space<vmem>>, vector<1x1x8x17xf32>
    %5 = vector.shape_cast %4 : vector<1x1x8x17xf32> to vector<8x17xf32>
    %6 = tpu.concatenate %3, %1, %5 in 1 : vector<8x17xf32>, vector<8x128xf32>, vector<8x17xf32> -> vector<8x162xf32>
    %7 = tpu.iota {dimensions = array<i32: 1>} : vector<1x128xi32>
    %c16_i32 = arith.constant 16 : i32
    %c0_i32 = arith.constant 0 : i32
    %8 = arith.cmpi eq, %c16_i32, %c0_i32 : i32
    %c1_i32 = arith.constant 1 : i32
    %9 = arith.select %8, %c1_i32, %c16_i32 : i32
    %10 = vector.broadcast %9 : i32 to vector<1x128xi32>
    %11 = arith.remsi %7, %10 : vector<1x128xi32>
    %c0_i32_10 = arith.constant 0 : i32
    %12 = vector.broadcast %c0_i32_10 : i32 to vector<1x128xi32>
    %13 = arith.cmpi ne, %11, %12 : vector<1x128xi32>
    %c0_i32_11 = arith.constant 0 : i32
    %14 = vector.broadcast %c0_i32_11 : i32 to vector<1x128xi32>
    %15 = arith.cmpi slt, %11, %14 : vector<1x128xi32>
    %c0_i32_12 = arith.constant 0 : i32
    %16 = arith.cmpi slt, %9, %c0_i32_12 : i32
    %17 = vector.broadcast %16 : i1 to vector<1x128xi1>
    %18 = vector.broadcast %17 : vector<1x128xi1> to vector<1x128xi1>
    %19 = arith.xori %15, %18 : vector<1x128xi1>
    %20 = arith.andi %19, %13 : vector<1x128xi1>
    %21 = vector.broadcast %9 : i32 to vector<1x128xi32>
    %22 = arith.addi %11, %21 : vector<1x128xi32>
    %23 = arith.select %20, %22, %11 : vector<1x128xi1>, vector<1x128xi32>
    %c0_i32_13 = arith.constant 0 : i32
    %24 = vector.broadcast %c0_i32_13 : i32 to vector<1x128xi32>
    %25 = arith.cmpi ne, %23, %24 : vector<1x128xi32>
    %c15_i32 = arith.constant 15 : i32
    %26 = vector.broadcast %c15_i32 : i32 to vector<1x128xi32>
    %27 = arith.cmpi ne, %23, %26 : vector<1x128xi32>
    %28 = vector.extract_strided_slice %6 {offsets = [0, 0], sizes = [8, 128], strides = [1, 1]} : vector<8x162xf32> to vector<8x128xf32>
    %cst = arith.constant 0.000000e+00 : f32
    %29 = vector.shape_cast %25 : vector<1x128xi1> to vector<1x128xi1>
    %30 = vector.broadcast %29 : vector<1x128xi1> to vector<8x128xi1>
    %31 = vector.broadcast %cst : f32 to vector<8x128xf32>
    %32 = arith.select %30, %28, %31 : vector<8x128xi1>, vector<8x128xf32>
    %33 = vector.extract_strided_slice %6 {offsets = [0, 1], sizes = [8, 128], strides = [1, 1]} : vector<8x162xf32> to vector<8x128xf32>
    %34 = vector.extract_strided_slice %6 {offsets = [0, 2], sizes = [8, 128], strides = [1, 1]} : vector<8x162xf32> to vector<8x128xf32>
    %cst_14 = arith.constant 0.000000e+00 : f32
    %35 = vector.shape_cast %27 : vector<1x128xi1> to vector<1x128xi1>
    %36 = vector.broadcast %35 : vector<1x128xi1> to vector<8x128xi1>
    %37 = vector.broadcast %cst_14 : f32 to vector<8x128xf32>
    %38 = arith.select %36, %34, %37 : vector<8x128xi1>, vector<8x128xf32>
    %39 = vector.extract_strided_slice %6 {offsets = [0, 16], sizes = [8, 128], strides = [1, 1]} : vector<8x162xf32> to vector<8x128xf32>
    %cst_15 = arith.constant 0.000000e+00 : f32
    %40 = vector.shape_cast %25 : vector<1x128xi1> to vector<1x128xi1>
    %41 = vector.broadcast %40 : vector<1x128xi1> to vector<8x128xi1>
    %42 = vector.broadcast %cst_15 : f32 to vector<8x128xf32>
    %43 = arith.select %41, %39, %42 : vector<8x128xi1>, vector<8x128xf32>
    %44 = vector.extract_strided_slice %6 {offsets = [0, 17], sizes = [8, 128], strides = [1, 1]} : vector<8x162xf32> to vector<8x128xf32>
    %45 = vector.extract_strided_slice %6 {offsets = [0, 18], sizes = [8, 128], strides = [1, 1]} : vector<8x162xf32> to vector<8x128xf32>
    %cst_16 = arith.constant 0.000000e+00 : f32
    %46 = vector.shape_cast %27 : vector<1x128xi1> to vector<1x128xi1>
    %47 = vector.broadcast %46 : vector<1x128xi1> to vector<8x128xi1>
    %48 = vector.broadcast %cst_16 : f32 to vector<8x128xf32>
    %49 = arith.select %47, %45, %48 : vector<8x128xi1>, vector<8x128xf32>
    %50 = vector.extract_strided_slice %6 {offsets = [0, 32], sizes = [8, 128], strides = [1, 1]} : vector<8x162xf32> to vector<8x128xf32>
    %cst_17 = arith.constant 0.000000e+00 : f32
    %51 = vector.shape_cast %25 : vector<1x128xi1> to vector<1x128xi1>
    %52 = vector.broadcast %51 : vector<1x128xi1> to vector<8x128xi1>
    %53 = vector.broadcast %cst_17 : f32 to vector<8x128xf32>
    %54 = arith.select %52, %50, %53 : vector<8x128xi1>, vector<8x128xf32>
    %55 = vector.extract_strided_slice %6 {offsets = [0, 33], sizes = [8, 128], strides = [1, 1]} : vector<8x162xf32> to vector<8x128xf32>
    %56 = vector.extract_strided_slice %6 {offsets = [0, 34], sizes = [8, 128], strides = [1, 1]} : vector<8x162xf32> to vector<8x128xf32>
    %cst_18 = arith.constant 0.000000e+00 : f32
    %57 = vector.shape_cast %27 : vector<1x128xi1> to vector<1x128xi1>
    %58 = vector.broadcast %57 : vector<1x128xi1> to vector<8x128xi1>
    %59 = vector.broadcast %cst_18 : f32 to vector<8x128xf32>
    %60 = arith.select %58, %56, %59 : vector<8x128xi1>, vector<8x128xf32>
    %61 = tpu.concatenate %32, %33, %38, %43, %44, %49, %54, %55, %60 in 0 : vector<8x128xf32>, vector<8x128xf32>, vector<8x128xf32>, vector<8x128xf32>, vector<8x128xf32>, vector<8x128xf32>, vector<8x128xf32>, vector<8x128xf32>, vector<8x128xf32> -> vector<72x128xf32>
    %62 = arith.truncf %61 : vector<72x128xf32> to vector<72x128xbf16>
    %c0_19 = arith.constant 0 : index
    %c0_20 = arith.constant 0 : index
    %63 = vector.load %arg5[%c0_19, %c0_20] : memref<24x72xbf16, #tpu.memory_space<vmem>>, vector<24x72xbf16>
    %cst_21 = arith.constant dense<0.000000e+00> : vector<24x128xf32>
    %64 = tpu.matmul %63, %62, %cst_21 {dimension_numbers = #tpu.dot_dimension_numbers<[1], [0], [0], [1], [0, 0, 1, 1], [], []>} : vector<24x72xbf16>, vector<72x128xbf16>, vector<24x128xf32> -> vector<24x128xf32>
    %c0_22 = arith.constant 0 : index
    %c0_23 = arith.constant 0 : index
    %65 = vector.load %arg6[%c0_22, %c0_23] : memref<24x1xf32, #tpu.memory_space<vmem>>, vector<24x1xf32>
    %66 = vector.broadcast %65 : vector<24x1xf32> to vector<24x128xf32>
    %67 = arith.addf %64, %66 : vector<24x128xf32>
    %cst_24 = arith.constant 0.000000e+00 : f32
    %cst_25 = arith.constant 6.000000e+00 : f32
    %68 = vector.broadcast %cst_24 : f32 to vector<24x128xf32>
    %69 = arith.maximumf %68, %67 : vector<24x128xf32>
    %70 = vector.broadcast %cst_25 : f32 to vector<24x128xf32>
    %71 = arith.minimumf %70, %69 : vector<24x128xf32>
    %c0_26 = arith.constant 0 : index
    %c0_27 = arith.constant 0 : index
    %72 = vector.load %arg7[%c0_26, %c0_27] : memref<8x24xbf16, #tpu.memory_space<vmem>>, vector<8x24xbf16>
    %73 = arith.truncf %71 : vector<24x128xf32> to vector<24x128xbf16>
    %cst_28 = arith.constant dense<0.000000e+00> : vector<8x128xf32>
    %74 = tpu.matmul %72, %73, %cst_28 {dimension_numbers = #tpu.dot_dimension_numbers<[1], [0], [0], [1], [0, 0, 1, 1], [], []>} : vector<8x24xbf16>, vector<24x128xbf16>, vector<8x128xf32> -> vector<8x128xf32>
    %c0_29 = arith.constant 0 : index
    %c0_30 = arith.constant 0 : index
    %75 = vector.load %arg8[%c0_29, %c0_30] : memref<8x1xf32, #tpu.memory_space<vmem>>, vector<8x1xf32>
    %76 = vector.broadcast %75 : vector<8x1xf32> to vector<8x128xf32>
    %77 = arith.addf %74, %76 : vector<8x128xf32>
    %c0_31 = arith.constant 0 : index
    %c0_32 = arith.constant 0 : index
    %c0_33 = arith.constant 0 : index
    %78 = vector.load %arg9[%c0_31, %c0_32, %c0_33] : memref<1x8x128xf32, #tpu.memory_space<vmem>>, vector<1x8x128xf32>
    %79 = vector.shape_cast %78 : vector<1x8x128xf32> to vector<8x128xf32>
    %80 = vector.shape_cast %77 : vector<8x128xf32> to vector<1x8x128xf32>
    tpu.vector_store %arg9[%c0_31, %c0_32, %c0_33], %80 {strides = array<i32>} : memref<1x8x128xf32, #tpu.memory_space<vmem>>, vector<1x8x128xf32>,
    return
  }
  func.func @transform_0(%arg0: i32, %arg1: i32) -> (i32, i32, i32) {
    %c0_i32 = arith.constant 0 : i32
    %c0_i32_0 = arith.constant 0 : i32
    return %arg0, %c0_i32, %arg1 : i32, i32, i32
  }
  func.func @transform_1(%arg0: i32, %arg1: i32) -> (i32, i32, i32, i32) {
    %c0_i32 = arith.constant 0 : i32
    %c0_i32_0 = arith.constant 0 : i32
    %c0_i32_1 = arith.constant 0 : i32
    return %arg0, %arg1, %c0_i32, %c0_i32_0 : i32, i32, i32, i32
  }
  func.func @transform_2(%arg0: i32, %arg1: i32) -> (i32, i32, i32, i32) {
    %c0_i32 = arith.constant 0 : i32
    %c0_i32_0 = arith.constant 0 : i32
    %c0_i32_1 = arith.constant 0 : i32
    return %arg0, %arg1, %c0_i32, %c0_i32_0 : i32, i32, i32, i32
  }
  func.func @transform_3(%arg0: i32, %arg1: i32) -> (i32, i32) {
    %c0_i32 = arith.constant 0 : i32
    %c0_i32_0 = arith.constant 0 : i32
    %c0_i32_1 = arith.constant 0 : i32
    return %c0_i32, %c0_i32_0 : i32, i32
  }
  func.func @transform_4(%arg0: i32, %arg1: i32) -> (i32, i32) {
    %c0_i32 = arith.constant 0 : i32
    %c0_i32_0 = arith.constant 0 : i32
    %c0_i32_1 = arith.constant 0 : i32
    return %c0_i32, %c0_i32_0 : i32, i32
  }
  func.func @transform_5(%arg0: i32, %arg1: i32) -> (i32, i32) {
    %c0_i32 = arith.constant 0 : i32
    %c0_i32_0 = arith.constant 0 : i32
    %c0_i32_1 = arith.constant 0 : i32
    return %c0_i32, %c0_i32_0 : i32, i32
  }
  func.func @transform_6(%arg0: i32, %arg1: i32) -> (i32, i32) {
    %c0_i32 = arith.constant 0 : i32
    %c0_i32_0 = arith.constant 0 : i32
    %c0_i32_1 = arith.constant 0 : i32
    return %c0_i32, %c0_i32_0 : i32, i32
  }
  func.func @transform_7(%arg0: i32, %arg1: i32) -> (i32, i32, i32) {
    %c0_i32 = arith.constant 0 : i32
    %c0_i32_0 = arith.constant 0 : i32
    return %arg0, %c0_i32, %arg1 : i32, i32, i32
  }
}

</mosaic_0001>

<llo_original>
// kernel: tpu_custom_call.1
$region0: #{tpu_custom_call.1}
  #allocation0 [shape = 'u32[]', space=smem, size = 0x4, offset = 0x4, fixed_abs, tag = 'smem constant byte address 0x4 - core index']
  #allocation1 [shape = 'u32[144,128]{1,0:T(1,128)}', space=vmem, size = 0x12000, scoped, tag = 'internal scratch']
  %s0 = inlined_call_operand.vmem [shape: f32[2,8,256], index: 0, kind: input, shape index: {}]
  %s1 = inlined_call_operand.hbm [shape: f32[2,2,8,17], index: 1, kind: input, shape index: {}]
  %s2 = inlined_call_operand.hbm [shape: f32[2,2,8,17], index: 2, kind: input, shape index: {}]
  %s3 = inlined_call_operand.hbm [shape: bf16[24,72], index: 3, kind: input, shape index: {}]
  %s4 = inlined_call_operand.vmem [shape: f32[24,1], index: 4, kind: input, shape index: {}]
  %s5 = inlined_call_operand.vmem [shape: bf16[8,24], index: 5, kind: input, shape index: {}]
  %s6 = inlined_call_operand.vmem [shape: f32[8,1], index: 6, kind: input, shape index: {}]
  %s7 = inlined_call_operand.hbm [shape: f32[2,8,256], index: 7, kind: output, shape index: {}]
  %s8 = sld [smem:[#allocation0]]
  $region73: #{tpu_custom_call.1} parent=0
    _
  %s10 = ssub.s32 1, %s8
  %s11 = scalar_select 0, %s10, %s8
  $region1: #{tpu_custom_call.1} parent=0
    #allocation2 [shape = 'u8[8192]{0}', space=vmem, size = 0x2000, scoped, tag = 'input window, operand 1']
    #allocation3 [shape = 's32[2]{0}', space=sflag, size = 0x8, scoped, tag = 'scoped memory for tpu_custom_call.1']
    #allocation4 [shape = 's32[2]{0}', space=sflag, size = 0x8, scoped, tag = 'scoped memory for tpu_custom_call.1']
    #allocation5 [shape = 'u8[8192]{0}', space=vmem, size = 0x2000, scoped, tag = 'input window, operand 2']
    #allocation6 [shape = 's32[2]{0}', space=sflag, size = 0x8, scoped, tag = 'scoped memory for tpu_custom_call.1']
    #allocation7 [shape = 'u8[6144]{0}', space=vmem, size = 0x1800, scoped, tag = 'input window, operand 3, single buffered']
    #allocation8 [shape = 'u8[8192]{0}', space=vmem, size = 0x2000, scoped, tag = 'output window, operand 0']
    %12 = vsyncpa [#allocation3], 0
    %s13 = scalar_lea.sflag [#allocation3], 1
    %14 = vsyncpa %s13, 0
    %15 = vsyncpa [#allocation6], 0
    %s16 = scalar_lea.sflag [#allocation6], 1
    %17 = vsyncpa %s16, 0
    %18 = vsyncpa [#allocation4], 0
    %s19 = scalar_lea.sflag [#allocation4], 1
    %20 = vsyncpa %s19, 0
    loop: start=0, step=1, limit=6
    $region2: #{tpu_custom_call.1} parent=1 // loop_pre_header
      _
    $region3: #{tpu_custom_call.1} parent=1 // loop_header
      %s22 = sphi 0, %s26
      %p23 = scmp.ge.s32.totalorder %s22, 6
      %s29 = sphi 0, %s41
      %s30 = sphi 0, %s37
      %s31 = sphi 0, %s29
      %s32 = sphi 0, %s30
      %s33 = sphi 0, %s31
      %s34 = sphi 0, %s32
      %s46 = sphi 0, %s48
      %s49 = sphi 0, %s46
      %s50 = sphi 0, %s49
      %s66 = sphi 0, %s50
      %s74 = sphi 0, %s76
      %s77 = sphi 0, %s74
      %s78 = sphi 0, %s77
      %s94 = sphi 0, %s78
      %s102 = sphi 0, %s104
      %s105 = sphi 0, %s102
      %s106 = sphi 0, %s105
      %s122 = sphi 0, %s106
      %s126 = sphi 0, %s126
      %s128 = sphi 0, %s126
      %s129 = sphi 0, %s128
      %s143 = sphi 0, %s129
      %s147 = sphi 0, %s147
      %s149 = sphi 0, %s147
      %s150 = sphi 0, %s149
      %s164 = sphi 0, %s150
      %s168 = sphi 0, %s168
      %s170 = sphi 0, %s168
      %s171 = sphi 0, %s170
      %s185 = sphi 0, %s171
      %s189 = sphi 0, %s189
      %s191 = sphi 0, %s189
      %s192 = sphi 0, %s191
      %s206 = sphi 0, %s192
      %s214 = sphi 0, %s216
      %s217 = sphi 0, %s214
      %s218 = sphi 0, %s217
      %s234 = sphi 0, %s218
    $region4: #{tpu_custom_call.1} parent=1 // loop_header_branch
      %25 = sbr.rel (%p23) target = $region8
    $region5: #{tpu_custom_call.1} parent=1 // loop_body
      %s27 = ssub.s32 %s22, 1
      %s28 = ssub.s32 %s22, 2
      %s35 = sadd.s32 1, %s30
      %p36 = scmp.ge.s32.totalorder %s35, 2
      %s37 = scalar_select %p36, 0, %s35
      %s38 = sadd.s32 1, %s29
      %s39 = scalar_select %p36, %s38, %s29
      %p40 = scmp.ge.s32.totalorder %s39, 2
      %s41 = scalar_select %p40, 0, %s39
      %s42 = ssub.s32 %s29, %s41
      %s43 = ssub.s32 %s30, %s37
      %s44 = sor.u32 %s42, %s43
      %p45 = scmp.eq.s32.totalorder %s44, 0
      %s47 = sadd.s32 %s46, 1
      %s48 = scalar_select %p45, %s46, %s47
      %p51 = pneg %p45
      %p52 = scmp.eq.s32.totalorder %s22, 3
      %p53 = por %p51, %p52
      %p54 = scmp.ne.s32.totalorder %s46, %s49
      %p55 = scmp.eq.s32.totalorder %s22, 0
      %p56 = por %p54, %p55
      %p57 = scmp.ne.s32.totalorder %s46, %s49
      %p58 = scmp.eq.s32.totalorder %s27, 3
      %p59 = por %p57, %p58
      %p60 = scmp.ne.s32.totalorder %s49, %s50
      %p61 = scmp.eq.s32.totalorder %s27, 0
      %p62 = por %p60, %p61
      %p63 = scmp.ne.s32.totalorder %s49, %s50
      %p64 = scmp.eq.s32.totalorder %s28, 3
      %p65 = por %p63, %p64
      %p67 = scmp.ne.s32.totalorder %s50, %s66
      %p68 = scmp.eq.s32.totalorder %s28, 0
      %p69 = por %p67, %p68
      %s70 = ssub.s32 %s29, %s41
      %s71 = ssub.s32 %s30, %s37
      %s72 = sor.u32 %s70, %s71
      %p73 = scmp.eq.s32.totalorder %s72, 0
      %s75 = sadd.s32 %s74, 1
      %s76 = scalar_select %p73, %s74, %s75
      %p79 = pneg %p73
      %p80 = scmp.eq.s32.totalorder %s22, 3
      %p81 = por %p79, %p80
      %p82 = scmp.ne.s32.totalorder %s74, %s77
      %p83 = scmp.eq.s32.totalorder %s22, 0
      %p84 = por %p82, %p83
      %p85 = scmp.ne.s32.totalorder %s74, %s77
      %p86 = scmp.eq.s32.totalorder %s27, 3
      %p87 = por %p85, %p86
      %p88 = scmp.ne.s32.totalorder %s77, %s78
      %p89 = scmp.eq.s32.totalorder %s27, 0
      %p90 = por %p88, %p89
      %p91 = scmp.ne.s32.totalorder %s77, %s78
      %p92 = scmp.eq.s32.totalorder %s28, 3
      %p93 = por %p91, %p92
      %p95 = scmp.ne.s32.totalorder %s78, %s94
      %p96 = scmp.eq.s32.totalorder %s28, 0
      %p97 = por %p95, %p96
      %s98 = ssub.s32 %s29, %s41
      %s99 = ssub.s32 %s30, %s37
      %s100 = sor.u32 %s98, %s99
      %p101 = scmp.eq.s32.totalorder %s100, 0
      %s103 = sadd.s32 %s102, 1
      %s104 = scalar_select %p101, %s102, %s103
      %p107 = pneg %p101
      %p108 = scmp.eq.s32.totalorder %s22, 3
      %p109 = por %p107, %p108
      %p110 = scmp.ne.s32.totalorder %s102, %s105
      %p111 = scmp.eq.s32.totalorder %s22, 0
      %p112 = por %p110, %p111
      %p113 = scmp.ne.s32.totalorder %s102, %s105
      %p114 = scmp.eq.s32.totalorder %s27, 3
      %p115 = por %p113, %p114
      %p116 = scmp.ne.s32.totalorder %s105, %s106
      %p117 = scmp.eq.s32.totalorder %s27, 0
      %p118 = por %p116, %p117
      %p119 = scmp.ne.s32.totalorder %s105, %s106
      %p120 = scmp.eq.s32.totalorder %s28, 3
      %p121 = por %p119, %p120
      %p123 = scmp.ne.s32.totalorder %s106, %s122
      %p124 = scmp.eq.s32.totalorder %s28, 0
      %p125 = por %p123, %p124
      %s127 = sadd.s32 %s126, 1
      %p130 = scmp.eq.s32.totalorder %s22, 3
      %p131 = scmp.ne.s32.totalorder %s126, %s128
      %p132 = scmp.eq.s32.totalorder %s22, 0
      %p133 = por %p131, %p132
      %p134 = scmp.ne.s32.totalorder %s126, %s128
      %p135 = scmp.eq.s32.totalorder %s27, 3
      %p136 = por %p134, %p135
      %p137 = scmp.ne.s32.totalorder %s128, %s129
      %p138 = scmp.eq.s32.totalorder %s27, 0
      %p139 = por %p137, %p138
      %p140 = scmp.ne.s32.totalorder %s128, %s129
      %p141 = scmp.eq.s32.totalorder %s28, 3
      %p142 = por %p140, %p141
      %p144 = scmp.ne.s32.totalorder %s129, %s143
      %p145 = scmp.eq.s32.totalorder %s28, 0
      %p146 = por %p144, %p145
      %s148 = sadd.s32 %s147, 1
      %p151 = scmp.eq.s32.totalorder %s22, 3
      %p152 = scmp.ne.s32.totalorder %s147, %s149
      %p153 = scmp.eq.s32.totalorder %s22, 0
      %p154 = por %p152, %p153
      %p155 = scmp.ne.s32.totalorder %s147, %s149
      %p156 = scmp.eq.s32.totalorder %s27, 3
      %p157 = por %p155, %p156
      %p158 = scmp.ne.s32.totalorder %s149, %s150
      %p159 = scmp.eq.s32.totalorder %s27, 0
      %p160 = por %p158, %p159
      %p161 = scmp.ne.s32.totalorder %s149, %s150
      %p162 = scmp.eq.s32.totalorder %s28, 3
      %p163 = por %p161, %p162
      %p165 = scmp.ne.s32.totalorder %s150, %s164
      %p166 = scmp.eq.s32.totalorder %s28, 0
      %p167 = por %p165, %p166
      %s169 = sadd.s32 %s168, 1
      %p172 = scmp.eq.s32.totalorder %s22, 3
      %p173 = scmp.ne.s32.totalorder %s168, %s170
      %p174 = scmp.eq.s32.totalorder %s22, 0
      %p175 = por %p173, %p174
      %p176 = scmp.ne.s32.totalorder %s168, %s170
      %p177 = scmp.eq.s32.totalorder %s27, 3
      %p178 = por %p176, %p177
      %p179 = scmp.ne.s32.totalorder %s170, %s171
      %p180 = scmp.eq.s32.totalorder %s27, 0
      %p181 = por %p179, %p180
      %p182 = scmp.ne.s32.totalorder %s170, %s171
      %p183 = scmp.eq.s32.totalorder %s28, 3
      %p184 = por %p182, %p183
      %p186 = scmp.ne.s32.totalorder %s171, %s185
      %p187 = scmp.eq.s32.totalorder %s28, 0
      %p188 = por %p186, %p187
      %s190 = sadd.s32 %s189, 1
      %p193 = scmp.eq.s32.totalorder %s22, 3
      %p194 = scmp.ne.s32.totalorder %s189, %s191
      %p195 = scmp.eq.s32.totalorder %s22, 0
      %p196 = por %p194, %p195
      %p197 = scmp.ne.s32.totalorder %s189, %s191
      %p198 = scmp.eq.s32.totalorder %s27, 3
      %p199 = por %p197, %p198
      %p200 = scmp.ne.s32.totalorder %s191, %s192
      %p201 = scmp.eq.s32.totalorder %s27, 0
      %p202 = por %p200, %p201
      %p203 = scmp.ne.s32.totalorder %s191, %s192
      %p204 = scmp.eq.s32.totalorder %s28, 3
      %p205 = por %p203, %p204
      %p207 = scmp.ne.s32.totalorder %s192, %s206
      %p208 = scmp.eq.s32.totalorder %s28, 0
      %p209 = por %p207, %p208
      %s210 = ssub.s32 %s29, %s41
      %s211 = ssub.s32 %s30, %s37
      %s212 = sor.u32 %s210, %s211
      %p213 = scmp.eq.s32.totalorder %s212, 0
      %s215 = sadd.s32 %s214, 1
      %s216 = scalar_select %p213, %s214, %s215
      %p219 = pneg %p213
      %p220 = scmp.eq.s32.totalorder %s22, 3
      %p221 = por %p219, %p220
      %p222 = scmp.ne.s32.totalorder %s214, %s217
      %p223 = scmp.eq.s32.totalorder %s22, 0
      %p224 = por %p222, %p223
      %p225 = scmp.ne.s32.totalorder %s214, %s217
      %p226 = scmp.eq.s32.totalorder %s27, 3
      %p227 = por %p225, %p226
      %p228 = scmp.ne.s32.totalorder %s217, %s218
      %p229 = scmp.eq.s32.totalorder %s27, 0
      %p230 = por %p228, %p229
      %p231 = scmp.ne.s32.totalorder %s217, %s218
      %p232 = scmp.eq.s32.totalorder %s28, 3
      %p233 = por %p231, %p232
      %p235 = scmp.ne.s32.totalorder %s218, %s234
      %p236 = scmp.eq.s32.totalorder %s28, 0
      %p237 = por %p235, %p236
      %p238 = scmp.le.s32.totalorder 1, %s22
      %p239 = scmp.lt.s32.totalorder %s22, 5
      %p240 = pnand %p238, %p239
      %p241 = pneg %p240
      // Predicated region
      $region9: #{tpu_custom_call.1} parent=5 // pred_check
        _
      $region10: #{tpu_custom_call.1} parent=5 // pred_check_branch
        %243 = sbr.rel (%p240) target = $region12
      $region11: #{tpu_custom_call.1} parent=5 // pred_region
        %s244 = ssub.s32 %s22, 1
        // Predicated region
        $region13: #{tpu_custom_call.1} parent=11 // pred_check
          %p245 = pneg %p139
        $region14: #{tpu_custom_call.1} parent=11 // pred_check_branch
          %247 = sbr.rel (%p245) target = $region16
        $region15: #{tpu_custom_call.1} parent=11 // pred_region
          %s249 = ssub.s32 192, 192
          %250 = vsyncadd [#allocation6], %s249
          %s251 = sshll.u32 [#allocation7], 4
          %s252 = int_to_ptr.vmem [resolvable:$true] %s251
          %257 = dma.hbm_to_vmem [thread:$0]  %s3, 192, %s252, [#allocation6], 64, 64, 4
        $region16: #{tpu_custom_call.1} parent=11 // pred_fallthru
          _
        // Predicated region
        $region17: #{tpu_custom_call.1} parent=11 // pred_check
          %p258 = pneg %p160
        $region18: #{tpu_custom_call.1} parent=11 // pred_check_branch
          %260 = sbr.rel (%p258) target = $region20
        $region19: #{tpu_custom_call.1} parent=11 // pred_region
          _
        $region20: #{tpu_custom_call.1} parent=11 // pred_fallthru
          _
        // Predicated region
        $region21: #{tpu_custom_call.1} parent=11 // pred_check
          %p261 = pneg %p181
        $region22: #{tpu_custom_call.1} parent=11 // pred_check_branch
          %263 = sbr.rel (%p261) target = $region24
        $region23: #{tpu_custom_call.1} parent=11 // pred_region
          _
        $region24: #{tpu_custom_call.1} parent=11 // pred_fallthru
          _
        // Predicated region
        $region25: #{tpu_custom_call.1} parent=11 // pred_check
          %p264 = pneg %p202
        $region26: #{tpu_custom_call.1} parent=11 // pred_check_branch
          %266 = sbr.rel (%p264) target = $region28
        $region27: #{tpu_custom_call.1} parent=11 // pred_region
          _
        $region28: #{tpu_custom_call.1} parent=11 // pred_fallthru
          _
      $region12: #{tpu_custom_call.1} parent=5 // pred_fallthru
        _
      %p267 = scmp.lt.s32.totalorder %s22, 4
      // Predicated region
      $region29: #{tpu_custom_call.1} parent=5 // pred_check
        %p268 = pneg %p267
      $region30: #{tpu_custom_call.1} parent=5 // pred_check_branch
        %270 = sbr.rel (%p268) target = $region32
      $region31: #{tpu_custom_call.1} parent=5 // pred_region
        // Predicated region
        $region33: #{tpu_custom_call.1} parent=31 // pred_check
          %p271 = pneg %p56
        $region34: #{tpu_custom_call.1} parent=31 // pred_check_branch
          %273 = sbr.rel (%p271) target = $region36
        $region35: #{tpu_custom_call.1} parent=31 // pred_region
          %p274 = scmp.lt.s32.totalorder %s29, 1
          %s275 = scalar_select %p274, %s29, 1
          %p276 = scmp.lt.s32.totalorder %s30, 1
          %s277 = scalar_select %p276, %s30, 1
          %s278 = smul.addr %s275, 2
          %s279 = sadd.s32 %s277, %s278
          %s280 = smul.addr %s279, 8
          %s281 = scalar_lea.vmem %s0, %s280
        $region36: #{tpu_custom_call.1} parent=31 // pred_fallthru
          _
        // Predicated region
        $region37: #{tpu_custom_call.1} parent=31 // pred_check
          %p282 = pneg %p84
        $region38: #{tpu_custom_call.1} parent=31 // pred_check_branch
          %284 = sbr.rel (%p282) target = $region40
        $region39: #{tpu_custom_call.1} parent=31 // pred_region
          %s285 = sand.u32 %s74, 1
          %s286 = scalar_lea.sflag [#allocation3], %s285
          %s287 = sand.u32 %s74, 1
          %s288 = smul.addr %s287, 8
          %s289 = scalar_lea.vmem [#allocation2], %s288
          %s291 = ssub.s32 128, 128
          %292 = vsyncadd %s286, %s291
          %s293 = smul.addr %s29, 2
          %s294 = sadd.s32 %s30, %s293
          %s295 = smul.addr %s294, 128
          %s296 = scalar_lea.hbm %s1, %s295
          %s298 = sshll.u32 %s289, 4
          %s299 = int_to_ptr.vmem [resolvable:$true] %s298
          %301 = dma.hbm_to_vmem [thread:$0]  %s296, 128, %s299, %s286
        $region40: #{tpu_custom_call.1} parent=31 // pred_fallthru
          _
        // Predicated region
        $region41: #{tpu_custom_call.1} parent=31 // pred_check
          %p302 = pneg %p112
        $region42: #{tpu_custom_call.1} parent=31 // pred_check_branch
          %304 = sbr.rel (%p302) target = $region44
        $region43: #{tpu_custom_call.1} parent=31 // pred_region
          %s305 = sand.u32 %s22, 1
          %s306 = scalar_lea.sflag [#allocation6], %s305
          %s307 = sand.u32 %s102, 1
          %s308 = smul.addr %s307, 8
          %s309 = scalar_lea.vmem [#allocation5], %s308
          %s311 = ssub.s32 128, 128
          %312 = vsyncadd %s306, %s311
          %s313 = smul.addr %s29, 2
          %s314 = sadd.s32 %s30, %s313
          %s315 = smul.addr %s314, 128
          %s316 = scalar_lea.hbm %s2, %s315
          %s318 = sshll.u32 %s309, 4
          %s319 = int_to_ptr.vmem [resolvable:$true] %s318
          %321 = dma.hbm_to_vmem [thread:$0]  %s316, 128, %s319, %s306
        $region44: #{tpu_custom_call.1} parent=31 // pred_fallthru
          _
      $region32: #{tpu_custom_call.1} parent=5 // pred_fallthru
        _
      %p322 = scmp.le.s32.totalorder 1, %s22
      %p323 = scmp.lt.s32.totalorder %s22, 5
      %p324 = pnand %p322, %p323
      %p325 = pneg %p324
      // Predicated region
      $region45: #{tpu_custom_call.1} parent=5 // pred_check
        _
      $region46: #{tpu_custom_call.1} parent=5 // pred_check_branch
        %327 = sbr.rel (%p324) target = $region48
      $region47: #{tpu_custom_call.1} parent=5 // pred_region
        %s328 = ssub.s32 %s22, 1
        %s329 = sand.u32 %s77, 1
        %s330 = scalar_lea.sflag [#allocation3], %s329
        %s331 = sand.u32 %s77, 1
        %s332 = smul.addr %s331, 8
        %s333 = scalar_lea.vmem [#allocation2], %s332
        // Predicated region
        $region49: #{tpu_custom_call.1} parent=47 // pred_check
          %p334 = pneg %p90
        $region50: #{tpu_custom_call.1} parent=47 // pred_check_branch
          %336 = sbr.rel (%p334) target = $region52
        $region51: #{tpu_custom_call.1} parent=47 // pred_region
          %337 = dma.done %s330, 128
        $region52: #{tpu_custom_call.1} parent=47 // pred_fallthru
          _
        %s338 = sand.u32 %s27, 1
        %s339 = scalar_lea.sflag [#allocation6], %s338
        %s340 = sand.u32 %s105, 1
        %s341 = smul.addr %s340, 8
        %s342 = scalar_lea.vmem [#allocation5], %s341
        // Predicated region
        $region53: #{tpu_custom_call.1} parent=47 // pred_check
          %p343 = pneg %p118
        $region54: #{tpu_custom_call.1} parent=47 // pred_check_branch
          %345 = sbr.rel (%p343) target = $region56
        $region55: #{tpu_custom_call.1} parent=47 // pred_region
          %346 = dma.done %s339, 128
        $region56: #{tpu_custom_call.1} parent=47 // pred_fallthru
          _
        // Predicated region
        $region57: #{tpu_custom_call.1} parent=47 // pred_check
          %p347 = pneg %p139
        $region58: #{tpu_custom_call.1} parent=47 // pred_check_branch
          %349 = sbr.rel (%p347) target = $region60
        $region59: #{tpu_custom_call.1} parent=47 // pred_region
          %350 = dma.done [#allocation6], 192
        $region60: #{tpu_custom_call.1} parent=47 // pred_fallthru
          _
        %p351 = scmp.lt.s32.totalorder %s31, 1
        %s352 = scalar_select %p351, %s31, 1
        %p353 = scmp.lt.s32.totalorder %s32, 1
        %s354 = scalar_select %p353, %s32, 1
        %s355 = smul.addr %s352, 2
        %s356 = sadd.s32 %s354, %s355
        %s357 = smul.addr %s356, 8
        %s358 = scalar_lea.vmem %s0, %s357
        %p359 = pneg %p62
        %p360 = pneg %p59
        %s361 = sand.u32 %s77, 1
        %s362 = scalar_lea.sflag [#allocation3], %s361
        %s363 = sand.u32 %s77, 1
        %s364 = smul.addr %s363, 8
        %s365 = scalar_lea.vmem [#allocation2], %s364
        %p366 = pneg %p90
        %p367 = pneg %p87
        %s368 = sand.u32 %s27, 1
        %s369 = scalar_lea.sflag [#allocation6], %s368
        %s370 = sand.u32 %s105, 1
        %s371 = smul.addr %s370, 8
        %s372 = scalar_lea.vmem [#allocation5], %s371
        %p373 = pneg %p118
        %p374 = pneg %p115
        %p375 = pneg %p139
        %p376 = pneg %p136
        %p377 = pneg %p160
        %p378 = pneg %p157
        %p379 = pneg %p181
        %p380 = pneg %p178
        %p381 = pneg %p202
        %p382 = pneg %p199
        %p383 = pneg %p230
        %p384 = pneg %p227
        %s385 = sand.u32 %s217, 1
        %s386 = scalar_lea.sflag [#allocation4], %s385
        %s387 = sand.u32 %s217, 1
        %s388 = smul.addr %s387, 8
        %s389 = scalar_lea.vmem [#allocation8], %s388
        %p390 = scmp.lt.s32.totalorder %s31, 1
        %s391 = scalar_select %p390, %s31, 1
        %p392 = scmp.lt.s32.totalorder %s32, 1
        %s393 = scalar_select %p392, %s32, 1
        %s394 = smul.addr %s391, 2
        %s395 = sadd.s32 %s393, %s394
        %s396 = smul.addr %s395, 8
        %s397 = scalar_lea.vmem %s0, %s396
        %v399 = vld [vmem:[%s397] sm:$0xff]
        %v400 = vld [vmem:[%s333] sm:$0xff]
        %v401 = vld [vmem:[%s342] sm:$0xff]
        %403 = vrot.lane.b32.xlu0 %v399, 17
        %v404 = vpop.permute.xlu0 %403
        %407 = vrot.lane.b32.xlu0 %v401, 17
        %v408 = vpop.permute.xlu0 %407
        %vm410 = vcmask 138240
        %v411 = vsel %vm410, %v400, %v404
        %v412 = vsel %vm410, %v404, %v408
        %v413 = vlaneseq
        %v414 = vand.u32 %v413, 127
        %vm415 = vcmp.lt.s32.totalorder %v414, 0
        %v416 = vsub.s32 0, %v414
        %v417 = vsel %vm415, %v416, %v414
        %v418 = vshrl.u32 %v417, 4
        %v419 = vand.u32 %v417, 15
        %v420 = vsub.s32 0, %v419
        %v421 = vsel %vm415, %v420, %v419
        %vm422 = vcmp.ne.s32.totalorder %v421, 0
        %vm423 = vcmp.lt.s32.totalorder %v421, 0
        %vm424 = vmand %vm423, %vm422
        %v425 = vadd.s32 %v421, 16
        %v426 = vsel %vm424, %v425, %v421
        %vm427 = vcmp.ne.s32.totalorder %v426, 0
        %vm428 = vcmp.ne.s32.totalorder %v426, 15
        %v429 = vsel %vm427, 1, 0
        %vm430 = vcmp.eq.s32.totalorder %v429, 1
        %v431 = vsel %vm430, %v411, 0.0
        %v432 = vsel %vm428, 1, 0
        %vm433 = vcmp.eq.s32.totalorder %v432, 1
        %436 = vrot.lane.b32.xlu0 %v411, 126
        %v437 = vpop.permute.xlu0 %436
        %438 = vrot.lane.b32.xlu0 %v412, 126
        %v439 = vpop.permute.xlu0 %438
        %vm440 = vcmask 1031168
        %v441 = vsel %vm440, %v437, %v439
        %v443 = vsel %vm433, %v441, 0.0
        %444 = vrot.lane.b32.xlu0 %v411, 112
        %v445 = vpop.permute.xlu0 %444
        %446 = vrot.lane.b32.xlu0 %v412, 112
        %v447 = vpop.permute.xlu0 %446
        %vm448 = vcmask 916480
        %v449 = vsel %vm448, %v445, %v447
        %v451 = vsel %vm430, %v449, 0.0
        %452 = vrot.lane.b32.xlu0 %v411, 110
        %v453 = vpop.permute.xlu0 %452
        %454 = vrot.lane.b32.xlu0 %v412, 110
        %v455 = vpop.permute.xlu0 %454
        %vm456 = vcmask 900096
        %v457 = vsel %vm456, %v453, %v455
        %v459 = vsel %vm433, %v457, 0.0
        %460 = vrot.lane.b32.xlu0 %v411, 96
        %v461 = vpop.permute.xlu0 %460
        %462 = vrot.lane.b32.xlu0 %v412, 96
        %v463 = vpop.permute.xlu0 %462
        %vm464 = vcmask 785408
        %v465 = vsel %vm464, %v461, %v463
        %v467 = vsel %vm430, %v465, 0.0
        %468 = vrot.lane.b32.xlu0 %v411, 94
        %v469 = vpop.permute.xlu0 %468
        %470 = vrot.lane.b32.xlu0 %v412, 94
        %v471 = vpop.permute.xlu0 %470
        %vm472 = vcmask 769024
        %v473 = vsel %vm472, %v469, %v471
        %v475 = vsel %vm433, %v473, 0.0
        %476 = vrot.lane.b32.xlu0 %v411, 127
        %v477 = vpop.permute.xlu0 %476
        %478 = vrot.lane.b32.xlu0 %v412, 127
        %v479 = vpop.permute.xlu0 %478
        %vm480 = vcmask 1039360
        %v481 = vsel %vm480, %v477, %v479
        %483 = vrot.lane.b32.xlu0 %v411, 111
        %v484 = vpop.permute.xlu0 %483
        %485 = vrot.lane.b32.xlu0 %v412, 111
        %v486 = vpop.permute.xlu0 %485
        %vm487 = vcmask 908288
        %v488 = vsel %vm487, %v484, %v486
        %490 = vrot.lane.b32.xlu0 %v411, 95
        %v491 = vpop.permute.xlu0 %490
        %492 = vrot.lane.b32.xlu0 %v412, 95
        %v493 = vpop.permute.xlu0 %492
        %vm494 = vcmask 777216
        %v495 = vsel %vm494, %v491, %v493
        %v497 = vpack.c.bf16 %v481, %v431
        %v498 = vpack.c.bf16 %v451, %v443
        %v499 = vpack.c.bf16 %v459, %v488
        %v500 = vpack.c.bf16 %v495, %v467
        %v501 = vpack.c.bf16 %v475, %v475
        %v502 = vld [vmem:[#allocation7] sm:$0xf]
        %v503 = vld [vmem:[#allocation7 + $0x4] sm:$0xf]
        %v504 = vld [vmem:[#allocation7 + $0x8] sm:$0xf]
        %v505 = vld [vmem:[%s4] sm:$0xff]
        %v506 = vld [vmem:[%s4 + $0x8] sm:$0xff]
        %v507 = vld [vmem:[%s4 + $0x10] sm:$0xff]
        %509 = vset.pattern.permute.xlu0 0
        %510 = vperm.xlu0 %509, %v505
        %v511 = vpop.permute.xlu0 %510
        %514 = vset.pattern.permute.xlu0 0
        %515 = vperm.xlu0 %514, %v506
        %v516 = vpop.permute.xlu0 %515
        %519 = vset.pattern.permute.xlu0 0
        %520 = vperm.xlu0 %519, %v507
        %v521 = vpop.permute.xlu0 %520
        %v526 = vunpack.c.l.b16 %v502
        %v527 = vunpack.c.l.b16 %v503
        %v528 = vunpack.c.l.b16 %v504
        %v529 = vpack.c.b16 %v527, %v526
        %v530 = vpack.c.b16 %v528, %v528
        %vm531 = vcmask 588800
        %v533 = vsel %vm531, %v529, 0
        %v536 = vsel %vm531, %v530, 0
        %vm538 = vcmask 1043456
        %v540 = vsel %vm538, %v501, 0
        %542 = vmatprep.subr.bf16.mxu0 0
        %543 = vmatpush1.bf16.msra.mxu0 0
        %544 = vmatprep.subr.bf16.mxu0 0
        %545 = vmatpush1.bf16.msra.mxu0 0
        %546 = vmatprep.subr.bf16.mxu0 0
        %547 = vmatpush1.bf16.msra.mxu0 0
        %548 = vmatprep.subr.bf16.mxu0 0
        %549 = vmatpush1.bf16.msra.mxu0 %v540
        %550 = vmatprep.subr.bf16.mxu0 0
        %551 = vmatpush1.bf16.msra.mxu0 %v500
        %552 = vmatprep.subr.bf16.mxu0 0
        %553 = vmatpush1.bf16.msra.mxu0 %v499
        %554 = vmatprep.subr.bf16.mxu0 0
        %555 = vmatpush1.bf16.msra.mxu0 %v498
        %556 = vmatprep.subr.bf16.mxu0 0
        %557 = vmatpush1.bf16.msra.mxu0 %v497
        %558 = vmatprep.subr.bf16.mxu0 0
        %559 = vmatpush2.bf16.msra.mxu0 0
        %560 = vmatprep.subr.bf16.mxu0 0
        %561 = vmatpush2.bf16.msra.mxu0 0
        %562 = vmatprep.subr.bf16.mxu0 0
        %563 = vmatpush2.bf16.msra.mxu0 0
        %564 = vmatprep.subr.bf16.mxu0 0
        %565 = vmatpush2.bf16.msra.mxu0 0
        %566 = vmatprep.subr.bf16.mxu0 0
        %567 = vmatpush2.bf16.msra.mxu0 0
        %568 = vmatprep.subr.bf16.mxu0 0
        %569 = vmatpush2.bf16.msra.mxu0 0
        %570 = vmatprep.subr.bf16.mxu0 0
        %571 = vmatpush2.bf16.msra.mxu0 0
        %572 = vmatprep.subr.bf16.mxu0 0
        %573 = vmatpush2.bf16.msra.mxu0 0
        %574 = vmatprep.mubr.bf16.mxu0 0
        %575 = vmatmul.mubr.bf16.gmra.mxu0 %v533
        %v576 = vpop.f32.mrf.mxu0
        %v577 = vadd.f32 %v511, %v576
        %v578 = vpop.f32.mrf.mxu0
        %v579 = vpop.f32.mrf.mxu0
        %v580 = vadd.f32 %v516, %v579
        %v581 = vpop.f32.mrf.mxu0
        %582 = vmatprep.mubr.bf16.mxu0 0
        %583 = vmatmul.mubr.bf16.gmra.mxu0 %v536
        %v584 = vpop.f32.mrf.mxu0
        %v585 = vadd.f32 %v521, %v584
        %v586 = vpop.f32.mrf.mxu0
        %v587 = vpop.f32.mrf.mxu0
        %v588 = vpop.f32.mrf.mxu0
        %589 = vdwg.mxu0
        %v590 = vmax.f32 %v577, 0.0
        %v591 = vmax.f32 %v580, 0.0
        %v592 = vmax.f32 %v585, 0.0
        %v593 = vmin.f32 %v590, 6.0
        %v594 = vmin.f32 %v591, 6.0
        %v595 = vmin.f32 %v592, 6.0
        %v596 = vld [vmem:[%s5] sm:$0xf]
        %v597 = vpack.c.bf16 %v594, %v593
        %v598 = vpack.c.bf16 %v595, %v595
        %v599 = vld [vmem:[%s6] sm:$0xff]
        %601 = vset.pattern.permute.xlu0 0
        %602 = vperm.xlu0 %601, %v599
        %v603 = vpop.permute.xlu0 %602
        %vm605 = vcmask 195584
        %v607 = vsel %vm605, %v596, 0
        %v610 = vsel %vm538, %v598, 0
        %612 = vmatprep.subr.bf16.mxu0 0
        %613 = vmatpush1.bf16.msra.mxu0 0
        %614 = vmatprep.subr.bf16.mxu0 0
        %615 = vmatpush1.bf16.msra.mxu0 0
        %616 = vmatprep.subr.bf16.mxu0 0
        %617 = vmatpush1.bf16.msra.mxu0 0
        %618 = vmatprep.subr.bf16.mxu0 0
        %619 = vmatpush1.bf16.msra.mxu0 0
        %620 = vmatprep.subr.bf16.mxu0 0
        %621 = vmatpush1.bf16.msra.mxu0 0
        %622 = vmatprep.subr.bf16.mxu0 0
        %623 = vmatpush1.bf16.msra.mxu0 0
        %624 = vmatprep.subr.bf16.mxu0 0
        %625 = vmatpush1.bf16.msra.mxu0 %v610
        %626 = vmatprep.subr.bf16.mxu0 0
        %627 = vmatpush1.bf16.msra.mxu0 %v597
        %628 = vmatprep.subr.bf16.mxu0 0
        %629 = vmatpush2.bf16.msra.mxu0 0
        %630 = vmatprep.subr.bf16.mxu0 0
        %631 = vmatpush2.bf16.msra.mxu0 0
        %632 = vmatprep.subr.bf16.mxu0 0
        %633 = vmatpush2.bf16.msra.mxu0 0
        %634 = vmatprep.subr.bf16.mxu0 0
        %635 = vmatpush2.bf16.msra.mxu0 0
        %636 = vmatprep.subr.bf16.mxu0 0
        %637 = vmatpush2.bf16.msra.mxu0 0
        %638 = vmatprep.subr.bf16.mxu0 0
        %639 = vmatpush2.bf16.msra.mxu0 0
        %640 = vmatprep.subr.bf16.mxu0 0
        %641 = vmatpush2.bf16.msra.mxu0 0
        %642 = vmatprep.subr.bf16.mxu0 0
        %643 = vmatpush2.bf16.msra.mxu0 0
        %644 = vmatprep.mubr.bf16.mxu0 0
        %645 = vmatmul.mubr.bf16.gmra.mxu0 %v607
        %v646 = vpop.f32.mrf.mxu0
        %v647 = vadd.f32 %v603, %v646
        %v648 = vpop.f32.mrf.mxu0
        %v649 = vpop.f32.mrf.mxu0
        %v650 = vpop.f32.mrf.mxu0
        %651 = vdwg.mxu0
        %652 = vst [vmem:[%s389] sm:$0xff] %v647
        %s653 = sand.u32 %s217, 1
        %s654 = scalar_lea.sflag [#allocation4], %s653
        %s655 = sand.u32 %s217, 1
        %s656 = smul.addr %s655, 8
        %s657 = scalar_lea.vmem [#allocation8], %s656
        // Predicated region
        $region61: #{tpu_custom_call.1} parent=47 // pred_check
          %p658 = pneg %p227
        $region62: #{tpu_custom_call.1} parent=47 // pred_check_branch
          %660 = sbr.rel (%p658) target = $region64
        $region63: #{tpu_custom_call.1} parent=47 // pred_region
          %s662 = ssub.s32 128, 128
          %663 = vsyncadd %s654, %s662
          %s664 = smul.addr %s31, 2
          %s665 = sadd.s32 %s32, %s664
          %s666 = smul.addr %s665, 128
          %s667 = scalar_lea.hbm %s7, %s666
          %s669 = sshll.u32 %s657, 4
          %s670 = int_to_ptr.vmem [resolvable:$true] %s669
          %672 = dma.vmem_to_hbm [thread:$0]  %s670, 128, %s667, %s654
        $region64: #{tpu_custom_call.1} parent=47 // pred_fallthru
          _
      $region48: #{tpu_custom_call.1} parent=5 // pred_fallthru
        _
      %p673 = scmp.le.s32.totalorder 2, %s22
      // Predicated region
      $region65: #{tpu_custom_call.1} parent=5 // pred_check
        %p674 = pneg %p673
      $region66: #{tpu_custom_call.1} parent=5 // pred_check_branch
        %676 = sbr.rel (%p674) target = $region68
      $region67: #{tpu_custom_call.1} parent=5 // pred_region
        %s677 = ssub.s32 %s22, 2
        // Predicated region
        $region69: #{tpu_custom_call.1} parent=67 // pred_check
          %p678 = pneg %p233
        $region70: #{tpu_custom_call.1} parent=67 // pred_check_branch
          %680 = sbr.rel (%p678) target = $region72
        $region71: #{tpu_custom_call.1} parent=67 // pred_region
          %s681 = sand.u32 %s218, 1
          %s682 = scalar_lea.sflag [#allocation4], %s681
          %s683 = sand.u32 %s218, 1
          %s684 = smul.addr %s683, 8
          %s685 = scalar_lea.vmem [#allocation8], %s684
          %686 = dma.done %s682, 128
        $region72: #{tpu_custom_call.1} parent=67 // pred_fallthru
          _
      $region68: #{tpu_custom_call.1} parent=5 // pred_fallthru
        _
    $region6: #{tpu_custom_call.1} parent=1 // loop_footer
      %s26 = sadd.s32 1, %s22
    $region7: #{tpu_custom_call.1} parent=1 // loop_footer_branch
      %21 = sbr.rel target = $region3
    $region8: #{tpu_custom_call.1} parent=1 // loop_exit
      _
    %687 = vsyncpa [#allocation3], 1
    %s688 = scalar_lea.sflag [#allocation3], 1
    %689 = vsyncpa %s688, 1
    %690 = vsyncpa [#allocation6], 1
    %s691 = scalar_lea.sflag [#allocation6], 1
    %692 = vsyncpa %s691, 1
    %693 = vsyncpa [#allocation4], 1
    %s694 = scalar_lea.sflag [#allocation4], 1
    %695 = vsyncpa %s694, 1

</llo_original>
